<compile_context>
chip_gen: v6e
topology: v6e:2x2x1
jax: 0.10.0
libtpu: 0.0.40
codegen_flags: <defaults>
</compile_context>

<pallas_src>
import functools

import jax
import jax.numpy as jnp
import numpy as np
from jax.experimental import pallas as pl
from jax.experimental.pallas import tpu as pltpu

LANE = 128  # TPU lane width; hidden/output feature dims are zero-padded to this.


def _round_up(v, m):
    return ((v + m - 1) // m) * m


# -----------------------------------------------------------------------------
# Kernel: fused 4-layer MLP on one (TM, INP) activation tile.
#   - casts x to the weight compute dtype (bf16) in VMEM,
#   - f32 MXU accumulation, f32 bias add + ReLU, bf16 inter-layer activations,
#   - bf16 final store (lane-dense, unmasked vst).
# -----------------------------------------------------------------------------
def mlp_kernel(x_ref, w_ref, b_ref, out_ref, *, n_in):
    cdt = w_ref.dtype                      # compute dtype (bf16)
    b = b_ref[...]                         # (4, 128) f32
    x = x_ref[...].astype(cdt)             # (TM, n_in) bf16

    w1 = w_ref[0][:n_in, :]                # (n_in, 128) slice of padded weights
    a1 = jnp.dot(x, w1, preferred_element_type=jnp.float32) + b[0:1, :]
    z1 = jnp.maximum(a1, 0.0).astype(cdt)

    a2 = jnp.dot(z1, w_ref[1], preferred_element_type=jnp.float32) + b[1:2, :]
    z2 = jnp.maximum(a2, 0.0).astype(cdt)

    a3 = jnp.dot(z2, w_ref[2], preferred_element_type=jnp.float32) + b[2:3, :]
    z3 = jnp.maximum(a3, 0.0).astype(cdt)

    a4 = jnp.dot(z3, w_ref[3], preferred_element_type=jnp.float32) + b[3:4, :]
    out_ref[...] = a4.astype(out_ref.dtype)


# -----------------------------------------------------------------------------
# Parameter packing (done ONCE at init):
#   weights: zero-pad each layer to (128, 128), stack -> (4, 128, 128) bf16
#   biases : zero-pad each layer to (128,),      stack -> (4, 128)      f32
# -----------------------------------------------------------------------------
def pack_params(params, inp, hid, out, compute_dtype=jnp.bfloat16):
    assert max(inp, hid, out) <= LANE, (
        f"feature dims must be <= {LANE}: got inp={inp}, hid={hid}, out={out}")

    def wpad(w, n_in, n_out):
        return jnp.zeros((LANE, LANE), jnp.float32).at[:n_in, :n_out].set(w)

    def bpad(b, n_out):
        return jnp.zeros((LANE,), jnp.float32).at[:n_out].set(b.reshape(-1))

    w_all = jnp.stack([
        wpad(params["w1"], inp, hid),
        wpad(params["w2"], hid, hid),
        wpad(params["w3"], hid, hid),
        wpad(params["w4"], hid, out),
    ]).astype(compute_dtype)                       # (4, 128, 128) bf16

    b_all = jnp.stack([
        bpad(params["b1"], hid),
        bpad(params["b2"], hid),
        bpad(params["b3"], hid),
        bpad(params["b4"], out),
    ]).astype(jnp.float32)                         # (4, 128) f32

    return w_all, b_all


# -----------------------------------------------------------------------------
# Wrapper: choose batch tiling, run the gridded kernel, slice the logits.
# -----------------------------------------------------------------------------
def bounds_mlp_forward(x, w_all, b_all, out_dim):
    B, n_in = x.shape

    # Batch tiling: tiles up to 1024 rows (amortize per-grid-step overhead);
    # keep >= 2 grid steps when the batch allows (v7x has 2 TensorCores).
    Bp = _round_up(B, 8)
    if Bp < 16:
        steps, TM = 1, Bp
    else:
        steps = max(2, -(-Bp // 1024))             # ceil(Bp / 1024), min 2
        TM = _round_up(-(-Bp // steps), 16)        # multiple of 16 (bf16 tiles)
        Bp = TM * steps

    # Row-only padding (no feature padding, no dtype cast) -- skipped entirely
    # when the batch is already tile-aligned.
    if Bp == B:
        x_in = x
    else:
        x_in = jnp.zeros((Bp, n_in), x.dtype).at[:B, :].set(x)

    flops = 2 * Bp * LANE * (n_in + 3 * LANE)
    bytes_accessed = (x_in.size * x_in.dtype.itemsize
                      + w_all.size * w_all.dtype.itemsize
                      + b_all.size * b_all.dtype.itemsize
                      + Bp * LANE * 2)             # bf16 output writeback

    out_pad = pl.pallas_call(
        functools.partial(mlp_kernel, n_in=n_in),
        out_shape=jax.ShapeDtypeStruct((Bp, LANE), jnp.bfloat16),
        grid_spec=pltpu.PrefetchScalarGridSpec(
            num_scalar_prefetch=0,
            grid=(steps,),
            in_specs=[
                # activations: streamed / double-buffered over the batch grid
                pl.BlockSpec((TM, n_in), lambda i: (i, 0)),
                # packed weights: constant index_map -> fetched once, VMEM-resident
                pl.BlockSpec((4, LANE, LANE), lambda i: (0, 0, 0)),
                # packed biases (tiny, f32)
                pl.BlockSpec((4, LANE), lambda i: (0, 0)),
            ],
            out_specs=pl.BlockSpec((TM, LANE), lambda i: (i, 0)),
        ),
        compiler_params=pltpu.CompilerParams(
            dimension_semantics=("parallel",)),
        cost_estimate=pl.CostEstimate(
            flops=flops, transcendentals=0, bytes_accessed=bytes_accessed),
    )(x_in, w_all, b_all)

    return out_pad[:B, :out_dim]


# -----------------------------------------------------------------------------
# PyTorch-style init (xavier_uniform_ weights, default nn.Linear bias init).
# Weights are stored pre-transposed as (in_features, out_features).
# -----------------------------------------------------------------------------
def xavier_uniform(key, fan_in, fan_out):
    bound = float(np.sqrt(6.0 / (fan_in + fan_out)))
    return jax.random.uniform(key, (fan_in, fan_out), jnp.float32, -bound, bound)


def linear_bias(key, fan_in, fan_out):
    bound = float(1.0 / np.sqrt(fan_in))
    return jax.random.uniform(key, (1, fan_out), jnp.float32, -bound, bound)


def init_params(key, inp, hid, out):
    ks = jax.random.split(key, 8)
    return {
        "w1": xavier_uniform(ks[0], inp, hid), "b1": linear_bias(ks[1], inp, hid),
        "w2": xavier_uniform(ks[2], hid, hid), "b2": linear_bias(ks[3], hid, hid),
        "w3": xavier_uniform(ks[4], hid, hid), "b3": linear_bias(ks[5], hid, hid),
        "w4": xavier_uniform(ks[6], hid, out), "b4": linear_bias(ks[7], hid, out),
    }


# -----------------------------------------------------------------------------
# Host (numpy) reference mirroring the kernel numerics: bf16 inputs/weights,
# f32 accumulation + bias + ReLU, bf16 inter-layer activations, bf16 output.
# -----------------------------------------------------------------------------
def reference_forward_numpy(x, params, compute_dtype=jnp.bfloat16):
    def c(v):
        return np.asarray(jnp.asarray(v).astype(compute_dtype).astype(jnp.float32))

    xr = c(x)
    z1 = np.maximum(xr @ c(params["w1"]) + np.asarray(params["b1"]), 0.0)
    z2 = np.maximum(c(z1) @ c(params["w2"]) + np.asarray(params["b2"]), 0.0)
    z3 = np.maximum(c(z2) @ c(params["w3"]) + np.asarray(params["b3"]), 0.0)
    a4 = c(z3) @ c(params["w4"]) + np.asarray(params["b4"])
    return c(a4)   # kernel stores bf16 logits


if __name__ == "__main__":
    # Small shapes consistent with the module: inp = embedding dim, hid hidden
    # units, out = 2 sentiment classes.  x plays the role of sentence2matirx
    # output (averaged prefix embeddings) for a batch of sentences.
    B, INP, HID, OUT = 2, 64, 32, 2

    key = jax.random.PRNGKey(0)
    k_x, k_p = jax.random.split(key)
    x = jax.random.normal(k_x, (B, INP), dtype=jnp.float32)
    params = init_params(k_p, INP, HID, OUT)

    w_all, b_all = pack_params(params, INP, HID, OUT, compute_dtype=jnp.bfloat16)

    logits = bounds_mlp_forward(x, w_all, b_all, OUT)
    logits = jax.block_until_ready(logits)

    ref = reference_forward_numpy(x, params, compute_dtype=jnp.bfloat16)
    # bf16 inputs/weights + bf16 final store, f32 accumulation: 2e-2 tolerance.
    np.testing.assert_allclose(np.asarray(logits, dtype=np.float32), ref,
                               rtol=2e-2, atol=2e-2)

    # predict() does argmax over dim=1 of the logits (glue, not hot path).
    _ = jnp.argmax(logits.astype(jnp.float32), axis=1)

    print("KERNEL_OK")
</pallas_src>

<mosaic_0001>
module attributes {stable_mosaic.version = 11 : i64} {
  func.func @mlp_kernel(%arg0: i32, %arg1: memref<8x64xf32, #tpu.memory_space<vmem>>, %arg2: memref<4x128x128xbf16, #tpu.memory_space<vmem>>, %arg3: memref<4x128xf32, #tpu.memory_space<vmem>>, %arg4: memref<8x128xbf16, #tpu.memory_space<vmem>>) attributes {dimension_semantics = [#tpu.dimension_semantics<parallel>], iteration_bounds = array<i64: 1>, scalar_prefetch = 0 : i64, scratch_operands = 0 : i64, tpu.core_type = #tpu.core_type<tc>, window_params = [{transform_indices = @transform_0, window_bounds = array<i64: 8, 64>}, {pipeline_mode = #tpu.pipeline_mode<synchronous>, transform_indices = @transform_1, window_bounds = array<i64: 4, 128, 128>}, {pipeline_mode = #tpu.pipeline_mode<synchronous>, transform_indices = @transform_2, window_bounds = array<i64: 4, 128>}, {transform_indices = @transform_3, window_bounds = array<i64: 8, 128>}]} {
    %c0 = arith.constant 0 : index
    %c0_0 = arith.constant 0 : index
    %0 = vector.load %arg3[%c0, %c0_0] : memref<4x128xf32, #tpu.memory_space<vmem>>, vector<4x128xf32>
    %c0_1 = arith.constant 0 : index
    %c0_2 = arith.constant 0 : index
    %1 = vector.load %arg1[%c0_1, %c0_2] : memref<8x64xf32, #tpu.memory_space<vmem>>, vector<8x64xf32>
    %2 = arith.truncf %1 : vector<8x64xf32> to vector<8x64xbf16>
    %c0_3 = arith.constant 0 : index
    %c0_4 = arith.constant 0 : index
    %c0_5 = arith.constant 0 : index
    %3 = vector.load %arg2[%c0_3, %c0_4, %c0_5] : memref<4x128x128xbf16, #tpu.memory_space<vmem>>, vector<1x128x128xbf16>
    %4 = vector.shape_cast %3 : vector<1x128x128xbf16> to vector<128x128xbf16>
    %5 = vector.extract_strided_slice %4 {offsets = [0, 0], sizes = [64, 128], strides = [1, 1]} : vector<128x128xbf16> to vector<64x128xbf16>
    %cst = arith.constant dense<0.000000e+00> : vector<8x128xf32>
    %6 = tpu.matmul %2, %5, %cst {dimension_numbers = #tpu.dot_dimension_numbers<[1], [0], [0], [1], [0, 0, 1, 1], [], []>} : vector<8x64xbf16>, vector<64x128xbf16>, vector<8x128xf32> -> vector<8x128xf32>
    %7 = vector.extract_strided_slice %0 {offsets = [0, 0], sizes = [1, 128], strides = [1, 1]} : vector<4x128xf32> to vector<1x128xf32>
    %8 = vector.broadcast %7 : vector<1x128xf32> to vector<8x128xf32>
    %9 = arith.addf %6, %8 : vector<8x128xf32>
    %cst_6 = arith.constant 0.000000e+00 : f32
    %10 = vector.broadcast %cst_6 : f32 to vector<8x128xf32>
    %11 = arith.maximumf %9, %10 : vector<8x128xf32>
    %12 = arith.truncf %11 : vector<8x128xf32> to vector<8x128xbf16>
    %c1 = arith.constant 1 : index
    %c0_7 = arith.constant 0 : index
    %c0_8 = arith.constant 0 : index
    %13 = vector.load %arg2[%c1, %c0_7, %c0_8] : memref<4x128x128xbf16, #tpu.memory_space<vmem>>, vector<1x128x128xbf16>
    %14 = vector.shape_cast %13 : vector<1x128x128xbf16> to vector<128x128xbf16>
    %cst_9 = arith.constant dense<0.000000e+00> : vector<8x128xf32>
    %15 = tpu.matmul %12, %14, %cst_9 {dimension_numbers = #tpu.dot_dimension_numbers<[1], [0], [0], [1], [0, 0, 1, 1], [], []>} : vector<8x128xbf16>, vector<128x128xbf16>, vector<8x128xf32> -> vector<8x128xf32>
    %16 = vector.extract_strided_slice %0 {offsets = [1, 0], sizes = [1, 128], strides = [1, 1]} : vector<4x128xf32> to vector<1x128xf32>
    %17 = vector.broadcast %16 : vector<1x128xf32> to vector<8x128xf32>
    %18 = arith.addf %15, %17 : vector<8x128xf32>
    %cst_10 = arith.constant 0.000000e+00 : f32
    %19 = vector.broadcast %cst_10 : f32 to vector<8x128xf32>
    %20 = arith.maximumf %18, %19 : vector<8x128xf32>
    %21 = arith.truncf %20 : vector<8x128xf32> to vector<8x128xbf16>
    %c2 = arith.constant 2 : index
    %c0_11 = arith.constant 0 : index
    %c0_12 = arith.constant 0 : index
    %22 = vector.load %arg2[%c2, %c0_11, %c0_12] : memref<4x128x128xbf16, #tpu.memory_space<vmem>>, vector<1x128x128xbf16>
    %23 = vector.shape_cast %22 : vector<1x128x128xbf16> to vector<128x128xbf16>
    %cst_13 = arith.constant dense<0.000000e+00> : vector<8x128xf32>
    %24 = tpu.matmul %21, %23, %cst_13 {dimension_numbers = #tpu.dot_dimension_numbers<[1], [0], [0], [1], [0, 0, 1, 1], [], []>} : vector<8x128xbf16>, vector<128x128xbf16>, vector<8x128xf32> -> vector<8x128xf32>
    %25 = vector.extract_strided_slice %0 {offsets = [2, 0], sizes = [1, 128], strides = [1, 1]} : vector<4x128xf32> to vector<1x128xf32>
    %26 = vector.broadcast %25 : vector<1x128xf32> to vector<8x128xf32>
    %27 = arith.addf %24, %26 : vector<8x128xf32>
    %cst_14 = arith.constant 0.000000e+00 : f32
    %28 = vector.broadcast %cst_14 : f32 to vector<8x128xf32>
    %29 = arith.maximumf %27, %28 : vector<8x128xf32>
    %30 = arith.truncf %29 : vector<8x128xf32> to vector<8x128xbf16>
    %c3 = arith.constant 3 : index
    %c0_15 = arith.constant 0 : index
    %c0_16 = arith.constant 0 : index
    %31 = vector.load %arg2[%c3, %c0_15, %c0_16] : memref<4x128x128xbf16, #tpu.memory_space<vmem>>, vector<1x128x128xbf16>
    %32 = vector.shape_cast %31 : vector<1x128x128xbf16> to vector<128x128xbf16>
    %cst_17 = arith.constant dense<0.000000e+00> : vector<8x128xf32>
    %33 = tpu.matmul %30, %32, %cst_17 {dimension_numbers = #tpu.dot_dimension_numbers<[1], [0], [0], [1], [0, 0, 1, 1], [], []>} : vector<8x128xbf16>, vector<128x128xbf16>, vector<8x128xf32> -> vector<8x128xf32>
    %34 = vector.extract_strided_slice %0 {offsets = [3, 0], sizes = [1, 128], strides = [1, 1]} : vector<4x128xf32> to vector<1x128xf32>
    %35 = vector.broadcast %34 : vector<1x128xf32> to vector<8x128xf32>
    %36 = arith.addf %33, %35 : vector<8x128xf32>
    %37 = arith.truncf %36 : vector<8x128xf32> to vector<8x128xbf16>
    %c0_18 = arith.constant 0 : index
    %c0_19 = arith.constant 0 : index
    %38 = vector.load %arg4[%c0_18, %c0_19] : memref<8x128xbf16, #tpu.memory_space<vmem>>, vector<8x128xbf16>
    tpu.vector_store %arg4[%c0_18, %c0_19], %37 {strides = array<i32>} : memref<8x128xbf16, #tpu.memory_space<vmem>>, vector<8x128xbf16>,
    return
  }
  func.func @transform_0(%arg0: i32) -> (i32, i32) {
    %c0_i32 = arith.constant 0 : i32
    %c0_i32_0 = arith.constant 0 : i32
    return %arg0, %c0_i32 : i32, i32
  }
  func.func @transform_1(%arg0: i32) -> (i32, i32, i32) {
    %c0_i32 = arith.constant 0 : i32
    %c0_i32_0 = arith.constant 0 : i32
    %c0_i32_1 = arith.constant 0 : i32
    %c0_i32_2 = arith.constant 0 : i32
    return %c0_i32, %c0_i32_0, %c0_i32_1 : i32, i32, i32
  }
  func.func @transform_2(%arg0: i32) -> (i32, i32) {
    %c0_i32 = arith.constant 0 : i32
    %c0_i32_0 = arith.constant 0 : i32
    %c0_i32_1 = arith.constant 0 : i32
    return %c0_i32, %c0_i32_0 : i32, i32
  }
  func.func @transform_3(%arg0: i32) -> (i32, i32) {
    %c0_i32 = arith.constant 0 : i32
    %c0_i32_0 = arith.constant 0 : i32
    return %arg0, %c0_i32 : i32, i32
  }
}

</mosaic_0001>

<llo_original>
// kernel: tpu_custom_call.1
$region0: #{tpu_custom_call.1}
  #allocation0 [shape = 'u32[]', space=smem, size = 0x4, offset = 0x4, fixed_abs, tag = 'smem constant byte address 0x4 - core index']
  #allocation1 [shape = 'u32[144,128]{1,0:T(1,128)}', space=vmem, size = 0x12000, scoped, tag = 'internal scratch']
  %s0 = inlined_call_operand.hbm [shape: f32[8,64], index: 0, kind: input, shape index: {}]
  %s1 = inlined_call_operand.hbm [shape: bf16[4,128,128], index: 1, kind: input, shape index: {}]
  %s2 = inlined_call_operand.hbm [shape: f32[4,128], index: 2, kind: input, shape index: {}]
  %s3 = inlined_call_operand.hbm [shape: bf16[8,128], index: 3, kind: output, shape index: {}]
  %s4 = sld [smem:[#allocation0]]
  $region34: #{tpu_custom_call.1} parent=0
    _
  %s6 = ssub.s32 1, %s4
  %s7 = scalar_select 0, %s6, %s4
  $region1: #{tpu_custom_call.1} parent=0
    #allocation2 [shape = 'u8[4096]{0}', space=vmem, size = 0x1000, scoped, tag = 'input window, operand 0, single buffered']
    #allocation3 [shape = 's32[1]{0}', space=sflag, size = 0x4, scoped, tag = 'scoped memory for tpu_custom_call.1']
    #allocation4 [shape = 's32[1]{0}', space=sflag, size = 0x4, scoped, tag = 'scoped memory for tpu_custom_call.1']
    #allocation5 [shape = 'u8[131072]{0}', space=vmem, size = 0x20000, scoped, tag = 'input window, operand 1, single buffered']
    #allocation6 [shape = 's32[1]{0}', space=sflag, size = 0x4, scoped, tag = 'scoped memory for tpu_custom_call.1']
    #allocation7 [shape = 'u8[2048]{0}', space=vmem, size = 0x800, scoped, tag = 'input window, operand 2, single buffered']
    #allocation8 [shape = 'u8[2048]{0}', space=vmem, size = 0x800, scoped, tag = 'output window, operand 0, single buffered']
    %8 = vsyncpa [#allocation3], 0
    %9 = vsyncpa [#allocation6], 0
    %10 = vsyncpa [#allocation4], 0
    // Predicated region
    $region2: #{tpu_custom_call.1} parent=1 // pred_check
      _
    $region3: #{tpu_custom_call.1} parent=1 // pred_check_branch
      %12 = sbr.rel (0) target = $region5
    $region4: #{tpu_custom_call.1} parent=1 // pred_region
      %s14 = ssub.s32 128, 128
      %15 = vsyncadd [#allocation3], %s14
      %s17 = sshll.u32 [#allocation2], 4
      %s18 = int_to_ptr.vmem [resolvable:$true] %s17
      %20 = dma.hbm_to_vmem [thread:$0]  %s0, 128, %s18, [#allocation3]
    $region5: #{tpu_custom_call.1} parent=1 // pred_fallthru
      _
    // Predicated region
    $region6: #{tpu_custom_call.1} parent=1 // pred_check
      _
    $region7: #{tpu_custom_call.1} parent=1 // pred_check_branch
      %22 = sbr.rel (0) target = $region9
    $region8: #{tpu_custom_call.1} parent=1 // pred_region
      %s24 = ssub.s32 4096, 4096
      %25 = vsyncadd [#allocation6], %s24
      %s26 = sshll.u32 [#allocation5], 4
      %s27 = int_to_ptr.vmem [resolvable:$true] %s26
      %32 = dma.hbm_to_vmem [thread:$0]  %s1, 4096, %s27, [#allocation6], 64, 64, 4
    $region9: #{tpu_custom_call.1} parent=1 // pred_fallthru
      _
    // Predicated region
    $region10: #{tpu_custom_call.1} parent=1 // pred_check
      _
    $region11: #{tpu_custom_call.1} parent=1 // pred_check_branch
      %34 = sbr.rel (0) target = $region13
    $region12: #{tpu_custom_call.1} parent=1 // pred_region
      %s36 = ssub.s32 64, 64
      %37 = vsyncadd [#allocation6], %s36
      %s39 = sshll.u32 [#allocation7], 4
      %s40 = int_to_ptr.vmem [resolvable:$true] %s39
      %42 = dma.hbm_to_vmem [thread:$0]  %s2, 64, %s40, [#allocation6]
    $region13: #{tpu_custom_call.1} parent=1 // pred_fallthru
      _
    // Predicated region
    $region14: #{tpu_custom_call.1} parent=1 // pred_check
      _
    $region15: #{tpu_custom_call.1} parent=1 // pred_check_branch
      %44 = sbr.rel (0) target = $region17
    $region16: #{tpu_custom_call.1} parent=1 // pred_region
      %45 = dma.done [#allocation3], 128
    $region17: #{tpu_custom_call.1} parent=1 // pred_fallthru
      _
    // Predicated region
    $region18: #{tpu_custom_call.1} parent=1 // pred_check
      _
    $region19: #{tpu_custom_call.1} parent=1 // pred_check_branch
      %47 = sbr.rel (0) target = $region21
    $region20: #{tpu_custom_call.1} parent=1 // pred_region
      %48 = dma.done [#allocation6], 4096
    $region21: #{tpu_custom_call.1} parent=1 // pred_fallthru
      _
    // Predicated region
    $region22: #{tpu_custom_call.1} parent=1 // pred_check
      _
    $region23: #{tpu_custom_call.1} parent=1 // pred_check_branch
      %50 = sbr.rel (0) target = $region25
    $region24: #{tpu_custom_call.1} parent=1 // pred_region
      %51 = dma.done [#allocation6], 64
    $region25: #{tpu_custom_call.1} parent=1 // pred_fallthru
      _
    %v53 = vld [vmem:[#allocation7] sm:$0xf]
    %v54 = vld [vmem:[#allocation2] sm:$0xff]
    %v55 = vpack.c.bf16 %v54, %v54
    %v56 = vld [vmem:[#allocation5] sm:$0xf]
    %v57 = vld [vmem:[#allocation5 + $0x4] sm:$0xf]
    %v58 = vld [vmem:[#allocation5 + $0x8] sm:$0xf]
    %v59 = vld [vmem:[#allocation5 + $0xc] sm:$0xf]
    %v60 = vld [vmem:[#allocation5 + $0x10] sm:$0xf]
    %v61 = vld [vmem:[#allocation5 + $0x14] sm:$0xf]
    %v62 = vld [vmem:[#allocation5 + $0x18] sm:$0xf]
    %v63 = vld [vmem:[#allocation5 + $0x1c] sm:$0xf]
    %v64 = vlaneseq
    %v65 = vshrl.u32 %v64, 7
    %v66 = vsub.s32 0, %v65
    %v67 = vrot.slane %v53, %v66
    %v76 = vunpack.c.l.b16 %v56
    %v77 = vunpack.c.l.b16 %v57
    %v78 = vunpack.c.l.b16 %v58
    %v79 = vunpack.c.l.b16 %v59
    %v80 = vunpack.c.l.b16 %v60
    %v81 = vunpack.c.l.b16 %v61
    %v82 = vunpack.c.l.b16 %v62
    %v83 = vunpack.c.l.b16 %v63
    %v84 = vpack.c.b16 %v77, %v76
    %v85 = vpack.c.b16 %v79, %v78
    %v86 = vpack.c.b16 %v81, %v80
    %v87 = vpack.c.b16 %v83, %v82
    %vm92 = vcmask 523264
    %v94 = vsel %vm92, %v55, 0
    %96 = vmatprep.subr.bf16.mxu0 0
    %97 = vmatpush1.bf16.msra.mxu0 0
    %98 = vmatprep.subr.bf16.mxu0 0
    %99 = vmatpush1.bf16.msra.mxu0 0
    %100 = vmatprep.subr.bf16.mxu0 0
    %101 = vmatpush1.bf16.msra.mxu0 0
    %102 = vmatprep.subr.bf16.mxu0 0
    %103 = vmatpush1.bf16.msra.mxu0 0
    %104 = vmatprep.subr.bf16.mxu0 0
    %105 = vmatpush1.bf16.msra.mxu0 %v87
    %106 = vmatprep.subr.bf16.mxu0 0
    %107 = vmatpush1.bf16.msra.mxu0 %v86
    %108 = vmatprep.subr.bf16.mxu0 0
    %109 = vmatpush1.bf16.msra.mxu0 %v85
    %110 = vmatprep.subr.bf16.mxu0 0
    %111 = vmatpush1.bf16.msra.mxu0 %v84
    %112 = vmatprep.subr.bf16.mxu0 0
    %113 = vmatpush2.bf16.msra.mxu0 0
    %114 = vmatprep.subr.bf16.mxu0 0
    %115 = vmatpush2.bf16.msra.mxu0 0
    %116 = vmatprep.subr.bf16.mxu0 0
    %117 = vmatpush2.bf16.msra.mxu0 0
    %118 = vmatprep.subr.bf16.mxu0 0
    %119 = vmatpush2.bf16.msra.mxu0 0
    %120 = vmatprep.subr.bf16.mxu0 0
    %121 = vmatpush2.bf16.msra.mxu0 0
    %122 = vmatprep.subr.bf16.mxu0 0
    %123 = vmatpush2.bf16.msra.mxu0 0
    %124 = vmatprep.subr.bf16.mxu0 0
    %125 = vmatpush2.bf16.msra.mxu0 0
    %126 = vmatprep.subr.bf16.mxu0 0
    %127 = vmatpush2.bf16.msra.mxu0 0
    %128 = vmatprep.mubr.bf16.mxu0 0
    %129 = vmatmul.mubr.bf16.gmra.mxu0 %v94
    %v130 = vpop.f32.mrf.mxu0
    %v131 = vadd.f32 %v67, %v130
    %v132 = vpop.f32.mrf.mxu0
    %v133 = vpop.f32.mrf.mxu0
    %v134 = vpop.f32.mrf.mxu0
    %135 = vdwg.mxu0
    %v136 = vmax.f32 %v131, 0.0
    %v137 = vpack.c.bf16 %v136, %v136
    %s138 = scalar_lea.vmem [#allocation5], 64
    %v139 = vld [vmem:[%s138] sm:$0xf]
    %v140 = vld [vmem:[%s138 + $0x4] sm:$0xf]
    %v141 = vld [vmem:[%s138 + $0x8] sm:$0xf]
    %v142 = vld [vmem:[%s138 + $0xc] sm:$0xf]
    %v143 = vld [vmem:[%s138 + $0x10] sm:$0xf]
    %v144 = vld [vmem:[%s138 + $0x14] sm:$0xf]
    %v145 = vld [vmem:[%s138 + $0x18] sm:$0xf]
    %v146 = vld [vmem:[%s138 + $0x1c] sm:$0xf]
    %v147 = vld [vmem:[%s138 + $0x20] sm:$0xf]
    %v148 = vld [vmem:[%s138 + $0x24] sm:$0xf]
    %v149 = vld [vmem:[%s138 + $0x28] sm:$0xf]
    %v150 = vld [vmem:[%s138 + $0x2c] sm:$0xf]
    %v151 = vld [vmem:[%s138 + $0x30] sm:$0xf]
    %v152 = vld [vmem:[%s138 + $0x34] sm:$0xf]
    %v153 = vld [vmem:[%s138 + $0x38] sm:$0xf]
    %v154 = vld [vmem:[%s138 + $0x3c] sm:$0xf]
    %v155 = vlaneseq
    %v156 = vshrl.u32 %v155, 7
    %v157 = vsub.s32 1, %v156
    %v158 = vrot.slane %v53, %v157
    %v175 = vunpack.c.l.b16 %v139
    %v176 = vunpack.c.l.b16 %v140
    %v177 = vunpack.c.l.b16 %v141
    %v178 = vunpack.c.l.b16 %v142
    %v179 = vunpack.c.l.b16 %v143
    %v180 = vunpack.c.l.b16 %v144
    %v181 = vunpack.c.l.b16 %v145
    %v182 = vunpack.c.l.b16 %v146
    %v183 = vunpack.c.l.b16 %v147
    %v184 = vunpack.c.l.b16 %v148
    %v185 = vunpack.c.l.b16 %v149
    %v186 = vunpack.c.l.b16 %v150
    %v187 = vunpack.c.l.b16 %v151
    %v188 = vunpack.c.l.b16 %v152
    %v189 = vunpack.c.l.b16 %v153
    %v190 = vunpack.c.l.b16 %v154
    %v191 = vpack.c.b16 %v176, %v175
    %v192 = vpack.c.b16 %v178, %v177
    %v193 = vpack.c.b16 %v180, %v179
    %v194 = vpack.c.b16 %v182, %v181
    %v195 = vpack.c.b16 %v184, %v183
    %v196 = vpack.c.b16 %v186, %v185
    %v197 = vpack.c.b16 %v188, %v187
    %v198 = vpack.c.b16 %v190, %v189
    %207 = vmatprep.subr.bf16.mxu0 0
    %208 = vmatpush1.bf16.msra.mxu0 %v198
    %209 = vmatprep.subr.bf16.mxu0 0
    %210 = vmatpush1.bf16.msra.mxu0 %v197
    %211 = vmatprep.subr.bf16.mxu0 0
    %212 = vmatpush1.bf16.msra.mxu0 %v196
    %213 = vmatprep.subr.bf16.mxu0 0
    %214 = vmatpush1.bf16.msra.mxu0 %v195
    %215 = vmatprep.subr.bf16.mxu0 0
    %216 = vmatpush1.bf16.msra.mxu0 %v194
    %217 = vmatprep.subr.bf16.mxu0 0
    %218 = vmatpush1.bf16.msra.mxu0 %v193
    %219 = vmatprep.subr.bf16.mxu0 0
    %220 = vmatpush1.bf16.msra.mxu0 %v192
    %221 = vmatprep.subr.bf16.mxu0 0
    %222 = vmatpush1.bf16.msra.mxu0 %v191
    %223 = vmatprep.subr.bf16.mxu0 0
    %224 = vmatpush2.bf16.msra.mxu0 0
    %225 = vmatprep.subr.bf16.mxu0 0
    %226 = vmatpush2.bf16.msra.mxu0 0
    %227 = vmatprep.subr.bf16.mxu0 0
    %228 = vmatpush2.bf16.msra.mxu0 0
    %229 = vmatprep.subr.bf16.mxu0 0
    %230 = vmatpush2.bf16.msra.mxu0 0
    %231 = vmatprep.subr.bf16.mxu0 0
    %232 = vmatpush2.bf16.msra.mxu0 0
    %233 = vmatprep.subr.bf16.mxu0 0
    %234 = vmatpush2.bf16.msra.mxu0 0
    %235 = vmatprep.subr.bf16.mxu0 0
    %236 = vmatpush2.bf16.msra.mxu0 0
    %237 = vmatprep.subr.bf16.mxu0 0
    %238 = vmatpush2.bf16.msra.mxu0 0
    %239 = vmatprep.mubr.bf16.mxu0 0
    %240 = vmatmul.mubr.bf16.gmra.mxu0 %v137
    %v241 = vpop.f32.mrf.mxu0
    %v242 = vadd.f32 %v158, %v241
    %v243 = vpop.f32.mrf.mxu0
    %v244 = vpop.f32.mrf.mxu0
    %v245 = vpop.f32.mrf.mxu0
    %246 = vdwg.mxu0
    %v247 = vmax.f32 %v242, 0.0
    %v248 = vpack.c.bf16 %v247, %v247
    %s249 = scalar_lea.vmem [#allocation5], 128
    %v250 = vld [vmem:[%s249] sm:$0xf]
    %v251 = vld [vmem:[%s249 + $0x4] sm:$0xf]
    %v252 = vld [vmem:[%s249 + $0x8] sm:$0xf]
    %v253 = vld [vmem:[%s249 + $0xc] sm:$0xf]
    %v254 = vld [vmem:[%s249 + $0x10] sm:$0xf]
    %v255 = vld [vmem:[%s249 + $0x14] sm:$0xf]
    %v256 = vld [vmem:[%s249 + $0x18] sm:$0xf]
    %v257 = vld [vmem:[%s249 + $0x1c] sm:$0xf]
    %v258 = vld [vmem:[%s249 + $0x20] sm:$0xf]
    %v259 = vld [vmem:[%s249 + $0x24] sm:$0xf]
    %v260 = vld [vmem:[%s249 + $0x28] sm:$0xf]
    %v261 = vld [vmem:[%s249 + $0x2c] sm:$0xf]
    %v262 = vld [vmem:[%s249 + $0x30] sm:$0xf]
    %v263 = vld [vmem:[%s249 + $0x34] sm:$0xf]
    %v264 = vld [vmem:[%s249 + $0x38] sm:$0xf]
    %v265 = vld [vmem:[%s249 + $0x3c] sm:$0xf]
    %v266 = vlaneseq
    %v267 = vshrl.u32 %v266, 7
    %v268 = vsub.s32 2, %v267
    %v269 = vrot.slane %v53, %v268
    %v286 = vunpack.c.l.b16 %v250
    %v287 = vunpack.c.l.b16 %v251
    %v288 = vunpack.c.l.b16 %v252
    %v289 = vunpack.c.l.b16 %v253
    %v290 = vunpack.c.l.b16 %v254
    %v291 = vunpack.c.l.b16 %v255
    %v292 = vunpack.c.l.b16 %v256
    %v293 = vunpack.c.l.b16 %v257
    %v294 = vunpack.c.l.b16 %v258
    %v295 = vunpack.c.l.b16 %v259
    %v296 = vunpack.c.l.b16 %v260
    %v297 = vunpack.c.l.b16 %v261
    %v298 = vunpack.c.l.b16 %v262
    %v299 = vunpack.c.l.b16 %v263
    %v300 = vunpack.c.l.b16 %v264
    %v301 = vunpack.c.l.b16 %v265
    %v302 = vpack.c.b16 %v287, %v286
    %v303 = vpack.c.b16 %v289, %v288
    %v304 = vpack.c.b16 %v291, %v290
    %v305 = vpack.c.b16 %v293, %v292
    %v306 = vpack.c.b16 %v295, %v294
    %v307 = vpack.c.b16 %v297, %v296
    %v308 = vpack.c.b16 %v299, %v298
    %v309 = vpack.c.b16 %v301, %v300
    %318 = vmatprep.subr.bf16.mxu0 0
    %319 = vmatpush1.bf16.msra.mxu0 %v309
    %320 = vmatprep.subr.bf16.mxu0 0
    %321 = vmatpush1.bf16.msra.mxu0 %v308
    %322 = vmatprep.subr.bf16.mxu0 0
    %323 = vmatpush1.bf16.msra.mxu0 %v307
    %324 = vmatprep.subr.bf16.mxu0 0
    %325 = vmatpush1.bf16.msra.mxu0 %v306
    %326 = vmatprep.subr.bf16.mxu0 0
    %327 = vmatpush1.bf16.msra.mxu0 %v305
    %328 = vmatprep.subr.bf16.mxu0 0
    %329 = vmatpush1.bf16.msra.mxu0 %v304
    %330 = vmatprep.subr.bf16.mxu0 0
    %331 = vmatpush1.bf16.msra.mxu0 %v303
    %332 = vmatprep.subr.bf16.mxu0 0
    %333 = vmatpush1.bf16.msra.mxu0 %v302
    %334 = vmatprep.subr.bf16.mxu0 0
    %335 = vmatpush2.bf16.msra.mxu0 0
    %336 = vmatprep.subr.bf16.mxu0 0
    %337 = vmatpush2.bf16.msra.mxu0 0
    %338 = vmatprep.subr.bf16.mxu0 0
    %339 = vmatpush2.bf16.msra.mxu0 0
    %340 = vmatprep.subr.bf16.mxu0 0
    %341 = vmatpush2.bf16.msra.mxu0 0
    %342 = vmatprep.subr.bf16.mxu0 0
    %343 = vmatpush2.bf16.msra.mxu0 0
    %344 = vmatprep.subr.bf16.mxu0 0
    %345 = vmatpush2.bf16.msra.mxu0 0
    %346 = vmatprep.subr.bf16.mxu0 0
    %347 = vmatpush2.bf16.msra.mxu0 0
    %348 = vmatprep.subr.bf16.mxu0 0
    %349 = vmatpush2.bf16.msra.mxu0 0
    %350 = vmatprep.mubr.bf16.mxu0 0
    %351 = vmatmul.mubr.bf16.gmra.mxu0 %v248
    %v352 = vpop.f32.mrf.mxu0
    %v353 = vadd.f32 %v269, %v352
    %v354 = vpop.f32.mrf.mxu0
    %v355 = vpop.f32.mrf.mxu0
    %v356 = vpop.f32.mrf.mxu0
    %357 = vdwg.mxu0
    %v358 = vmax.f32 %v353, 0.0
    %v359 = vpack.c.bf16 %v358, %v358
    %s360 = scalar_lea.vmem [#allocation5], 192
    %v361 = vld [vmem:[%s360] sm:$0xf]
    %v362 = vld [vmem:[%s360 + $0x4] sm:$0xf]
    %v363 = vld [vmem:[%s360 + $0x8] sm:$0xf]
    %v364 = vld [vmem:[%s360 + $0xc] sm:$0xf]
    %v365 = vld [vmem:[%s360 + $0x10] sm:$0xf]
    %v366 = vld [vmem:[%s360 + $0x14] sm:$0xf]
    %v367 = vld [vmem:[%s360 + $0x18] sm:$0xf]
    %v368 = vld [vmem:[%s360 + $0x1c] sm:$0xf]
    %v369 = vld [vmem:[%s360 + $0x20] sm:$0xf]
    %v370 = vld [vmem:[%s360 + $0x24] sm:$0xf]
    %v371 = vld [vmem:[%s360 + $0x28] sm:$0xf]
    %v372 = vld [vmem:[%s360 + $0x2c] sm:$0xf]
    %v373 = vld [vmem:[%s360 + $0x30] sm:$0xf]
    %v374 = vld [vmem:[%s360 + $0x34] sm:$0xf]
    %v375 = vld [vmem:[%s360 + $0x38] sm:$0xf]
    %v376 = vld [vmem:[%s360 + $0x3c] sm:$0xf]
    %v377 = vlaneseq
    %v378 = vshrl.u32 %v377, 7
    %v379 = vsub.s32 3, %v378
    %v380 = vrot.slane %v53, %v379
    %v397 = vunpack.c.l.b16 %v361
    %v398 = vunpack.c.l.b16 %v362
    %v399 = vunpack.c.l.b16 %v363
    %v400 = vunpack.c.l.b16 %v364
    %v401 = vunpack.c.l.b16 %v365
    %v402 = vunpack.c.l.b16 %v366
    %v403 = vunpack.c.l.b16 %v367
    %v404 = vunpack.c.l.b16 %v368
    %v405 = vunpack.c.l.b16 %v369
    %v406 = vunpack.c.l.b16 %v370
    %v407 = vunpack.c.l.b16 %v371
    %v408 = vunpack.c.l.b16 %v372
    %v409 = vunpack.c.l.b16 %v373
    %v410 = vunpack.c.l.b16 %v374
    %v411 = vunpack.c.l.b16 %v375
    %v412 = vunpack.c.l.b16 %v376
    %v413 = vpack.c.b16 %v398, %v397
    %v414 = vpack.c.b16 %v400, %v399
    %v415 = vpack.c.b16 %v402, %v401
    %v416 = vpack.c.b16 %v404, %v403
    %v417 = vpack.c.b16 %v406, %v405
    %v418 = vpack.c.b16 %v408, %v407
    %v419 = vpack.c.b16 %v410, %v409
    %v420 = vpack.c.b16 %v412, %v411
    %429 = vmatprep.subr.bf16.mxu0 0
    %430 = vmatpush1.bf16.msra.mxu0 %v420
    %431 = vmatprep.subr.bf16.mxu0 0
    %432 = vmatpush1.bf16.msra.mxu0 %v419
    %433 = vmatprep.subr.bf16.mxu0 0
    %434 = vmatpush1.bf16.msra.mxu0 %v418
    %435 = vmatprep.subr.bf16.mxu0 0
    %436 = vmatpush1.bf16.msra.mxu0 %v417
    %437 = vmatprep.subr.bf16.mxu0 0
    %438 = vmatpush1.bf16.msra.mxu0 %v416
    %439 = vmatprep.subr.bf16.mxu0 0
    %440 = vmatpush1.bf16.msra.mxu0 %v415
    %441 = vmatprep.subr.bf16.mxu0 0
    %442 = vmatpush1.bf16.msra.mxu0 %v414
    %443 = vmatprep.subr.bf16.mxu0 0
    %444 = vmatpush1.bf16.msra.mxu0 %v413
    %445 = vmatprep.subr.bf16.mxu0 0
    %446 = vmatpush2.bf16.msra.mxu0 0
    %447 = vmatprep.subr.bf16.mxu0 0
    %448 = vmatpush2.bf16.msra.mxu0 0
    %449 = vmatprep.subr.bf16.mxu0 0
    %450 = vmatpush2.bf16.msra.mxu0 0
    %451 = vmatprep.subr.bf16.mxu0 0
    %452 = vmatpush2.bf16.msra.mxu0 0
    %453 = vmatprep.subr.bf16.mxu0 0
    %454 = vmatpush2.bf16.msra.mxu0 0
    %455 = vmatprep.subr.bf16.mxu0 0
    %456 = vmatpush2.bf16.msra.mxu0 0
    %457 = vmatprep.subr.bf16.mxu0 0
    %458 = vmatpush2.bf16.msra.mxu0 0
    %459 = vmatprep.subr.bf16.mxu0 0
    %460 = vmatpush2.bf16.msra.mxu0 0
    %461 = vmatprep.mubr.bf16.mxu0 0
    %462 = vmatmul.mubr.bf16.gmra.mxu0 %v359
    %v463 = vpop.f32.mrf.mxu0
    %v464 = vadd.f32 %v380, %v463
    %v465 = vpop.f32.mrf.mxu0
    %v466 = vpop.f32.mrf.mxu0
    %v467 = vpop.f32.mrf.mxu0
    %468 = vdwg.mxu0
    %v469 = vpack.c.bf16 %v464, %v464
    %470 = vst [vmem:[#allocation8] sm:$0xf] %v469
    // Predicated region
    $region26: #{tpu_custom_call.1} parent=1 // pred_check
      _
    $region27: #{tpu_custom_call.1} parent=1 // pred_check_branch
      %472 = sbr.rel (0) target = $region29
    $region28: #{tpu_custom_call.1} parent=1 // pred_region
      %s474 = ssub.s32 64, 64
      %475 = vsyncadd [#allocation4], %s474
      %s477 = sshll.u32 [#allocation8], 4
      %s478 = int_to_ptr.vmem [resolvable:$true] %s477
      %480 = dma.vmem_to_hbm [thread:$0]  %s478, 64, %s3, [#allocation4]
    $region29: #{tpu_custom_call.1} parent=1 // pred_fallthru
      _
    // Predicated region
    $region30: #{tpu_custom_call.1} parent=1 // pred_check
      _
    $region31: #{tpu_custom_call.1} parent=1 // pred_check_branch
      %482 = sbr.rel (0) target = $region33
    $region32: #{tpu_custom_call.1} parent=1 // pred_region
      %483 = dma.done [#allocation4], 64
    $region33: #{tpu_custom_call.1} parent=1 // pred_fallthru
      _
    %484 = vsyncpa [#allocation3], 1
    %485 = vsyncpa [#allocation6], 1
    %486 = vsyncpa [#allocation4], 1

</llo_original>
